<compile_context>
chip_gen: v6e
topology: v6e:2x2x1
jax: 0.10.0
libtpu: 0.0.40
codegen_flags: <defaults>
</compile_context>

<pallas_src>
import math
import functools

import jax
import jax.numpy as jnp
from jax import lax
from jax.experimental import pallas as pl
from jax.experimental.pallas import tpu as pltpu


def _relative_position_bucket(rel, *, num_buckets, max_distance):
    """T5 bucket function with the same math/order as the PyTorch module
    (`rel >= 0` upper-half test, truncation toward zero of the log term).
    Pure jnp, so it is used both inside the Pallas kernel and in the
    pure-JAX reference."""
    nb = num_buckets // 2
    max_exact = nb // 2
    ret = jnp.where(rel >= 0, nb, 0).astype(jnp.int32)
    n = jnp.abs(rel)
    is_small = n < max_exact
    # clamp before the log so masked-out small entries never produce -inf
    n_safe = jnp.maximum(n, max_exact).astype(jnp.float32)
    val_if_large = max_exact + (
        jnp.log(n_safe / max_exact)
        / math.log(max_distance / max_exact)
        * (nb - max_exact)
    ).astype(jnp.int32)   # float->int32 truncates toward zero == torch .long()
    val_if_large = jnp.minimum(val_if_large, nb - 1)
    return ret + jnp.where(is_small, n, val_if_large)


def _rpb_kernel(wt_ref, out_ref, *, tile_rows, num_queries, num_keys,
                num_buckets, max_distance, strip_lanes):
    # wt_ref : (H_pad, B)    transposed, head-padded embedding table (resident)
    # out_ref: (H_pad, T*K)  lane-dense output tile = T full query rows
    T, K, Q = tile_rows, num_keys, num_queries
    i = pl.program_id(0)

    # --- Toeplitz strip -------------------------------------------------------
    # The only distinct values this tile needs are the K+T-1 relative positions
    # rel = k - q - (K - Q) for q in [i*T, (i+1)*T), k in [0, K).
    # Local strip lane j corresponds to rel_j = (Q - (i+1)*T) + j - (K - 1),
    # so row t of the tile reads strip lanes [T-1-t, T-1-t+K)  (static offsets).
    j = lax.broadcasted_iota(jnp.int32, (1, strip_lanes), 1)
    rel = j + (Q - K + 1 - (i + 1) * T)
    bucket = _relative_position_bucket(
        rel, num_buckets=num_buckets, max_distance=max_distance)   # (1, Lp) int32

    # Exact embedding gather on the tiny strip: one select per bucket.
    # (Bit-identical to jnp.take; avoids any MXU f32/bf16 precision questions.
    #  TODO(synk): a bf16-hi/lo one-hot matmul would also work if this ever
    #  shows up in a profile -- it does not, the strip is O(K+T) not O(K*T).)
    w = wt_ref[...]                                                # (H_pad, B) f32
    strip = jnp.zeros((w.shape[0], strip_lanes), jnp.float32)      # (H_pad, Lp)
    for b in range(num_buckets):
        strip = jnp.where(bucket == b, w[:, b:b + 1], strip)
    strip = strip.astype(out_ref.dtype)

    # --- Toeplitz expansion ---------------------------------------------------
    # Pure relayout: static lane shifts (XLU) + lane-dense stores, unrolled over
    # the T query rows of this tile.  Stores are unmasked when K % 128 == 0.
    for t in range(T):
        off = T - 1 - t
        out_ref[:, t * K:(t + 1) * K] = strip[:, off:off + K]


def _choose_tile_rows(num_queries, num_keys, num_heads_padded, out_itemsize, *,
                      target_lanes, max_unrolled_rows, max_tile_bytes):
    """Pick queries-per-tile T (a divisor of Q) such that:
       * the output block (H_pad, T*K) is legal: (T*K) % 128 == 0 or T == Q,
       * T*K <= target_lanes, T <= max_unrolled_rows (compile-time unroll cap),
       * the double-buffered output block fits max_tile_bytes (VMEM-aware),
       * grid >= 2 whenever possible (so both v7x TensorCores get work)."""
    Q, K = num_queries, num_keys
    divisors = [d for d in range(1, Q + 1) if Q % d == 0]
    legal = [d for d in divisors if (d * K) % 128 == 0 or d == Q]
    if not legal:
        legal = [Q]

    def dbuf_bytes(d):
        return 2 * num_heads_padded * d * K * out_itemsize

    fitting = [d for d in legal
               if d * K <= target_lanes
               and d <= max_unrolled_rows
               and dbuf_bytes(d) <= max_tile_bytes]
    if not fitting:
        # TODO(synk): for huge single-block shapes (Q prime and K unaligned)
        # this can still be one big block; padding Q to a composite size in the
        # wrapper would restore tiling.
        return min(legal)
    multi = [d for d in fitting if Q // d >= 2]
    return max(multi) if multi else max(fitting)


def relative_position_bias(weight, num_queries, num_keys, *, num_buckets,
                           max_distance, out_dtype=jnp.float32,
                           target_lanes=32768, max_unrolled_rows=256,
                           max_tile_bytes=8 * 1024 * 1024):
    """weight: (num_buckets, num_heads) f32 embedding table.
    Returns bias of shape (1, num_heads, num_queries, num_keys)."""
    assert weight.shape[0] == num_buckets
    num_heads = weight.shape[1]
    nb = num_buckets // 2
    max_exact = nb // 2
    if max_exact < 1 or max_distance <= max_exact:
        raise ValueError("need num_buckets >= 4 and max_distance > num_buckets // 4")

    out_dtype = jnp.dtype(out_dtype)
    # Pad heads to a full sublane group so every output store is unmasked.
    sub = 8 if out_dtype.itemsize == 4 else 16
    h_pad = ((num_heads + sub - 1) // sub) * sub

    tile_rows = _choose_tile_rows(
        num_queries, num_keys, h_pad, out_dtype.itemsize,
        target_lanes=target_lanes, max_unrolled_rows=max_unrolled_rows,
        max_tile_bytes=max_tile_bytes)
    tm = tile_rows * num_keys
    m_total = num_queries * num_keys
    grid = (num_queries // tile_rows,)
    strip_lanes = ((num_keys + tile_rows - 1 + 127) // 128) * 128

    # Transpose (and pad) the tiny table -> (H_pad, B): heads on sublanes.
    wt = weight.astype(jnp.float32).T
    if h_pad != num_heads:
        wt = jnp.pad(wt, ((0, h_pad - num_heads), (0, 0)))

    kernel = functools.partial(
        _rpb_kernel,
        tile_rows=tile_rows,
        num_queries=num_queries,
        num_keys=num_keys,
        num_buckets=num_buckets,
        max_distance=max_distance,
        strip_lanes=strip_lanes,
    )

    flat = pl.pallas_call(
        kernel,
        out_shape=jax.ShapeDtypeStruct((h_pad, m_total), out_dtype),
        grid=grid,
        in_specs=[pl.BlockSpec((h_pad, num_buckets), lambda i: (0, 0))],
        out_specs=pl.BlockSpec((h_pad, tm), lambda i: (0, i)),
        compiler_params=pltpu.CompilerParams(
            # independent output tiles -> shard across both TCs on v7x
            dimension_semantics=("parallel",),
            # tiles are small (<= max_tile_bytes double-buffered); well within
            # every generation's scoped VMEM
            vmem_limit_bytes=32 * 1024 * 1024,
        ),
    )(wt)

    # (H_pad, Q*K) -> (1, H_pad, Q, K): metadata-only reshape (split of the
    # minor dim); no transpose through HBM.  Drop head padding if any.
    bias = flat.reshape(1, h_pad, num_queries, num_keys)
    if h_pad != num_heads:
        bias = bias[:, :num_heads]
    return bias


def _reference(weight, num_queries, num_keys, *, num_buckets, max_distance):
    """Pure-JAX reference mirroring the PyTorch module."""
    I, J = num_queries, num_keys
    q_pos = jnp.arange(J - I, J, dtype=jnp.int32)
    k_pos = jnp.arange(J, dtype=jnp.int32)
    rel = k_pos[None, :] - q_pos[:, None]
    bucket = _relative_position_bucket(
        rel, num_buckets=num_buckets, max_distance=max_distance)
    bias = jnp.take(weight, bucket, axis=0)          # (Q, K, H)
    return jnp.transpose(bias, (2, 0, 1))[None]      # (1, H, Q, K)


if __name__ == "__main__":
    num_buckets = 32
    max_distance = 64
    num_heads = 8

    key = jax.random.PRNGKey(0)
    # nn.Embedding default init ~ N(0, 1); deterministic synthetic weights
    weight = jax.random.normal(key, (num_buckets, num_heads), dtype=jnp.float32)

    # Small config matching the module's toy usage (single tile, K < 128 ->
    # masked-store path).
    num_queries, num_keys = 8, 16
    bias = relative_position_bias(
        weight, num_queries, num_keys,
        num_buckets=num_buckets, max_distance=max_distance,
    )
    bias = jax.block_until_ready(bias)
    ref = _reference(
        weight, num_queries, num_keys,
        num_buckets=num_buckets, max_distance=max_distance,
    )
    assert bias.shape == (1, num_heads, num_queries, num_keys)
    assert jnp.allclose(bias, ref, atol=1e-6), "mismatch vs reference (small)"

    # 128-aligned config exercising the multi-tile parallel grid and the
    # lane-dense store path.
    num_queries2, num_keys2 = 64, 128
    bias2 = relative_position_bias(
        weight, num_queries2, num_keys2,
        num_buckets=num_buckets, max_distance=max_distance,
    )
    bias2 = jax.block_until_ready(bias2)
    ref2 = _reference(
        weight, num_queries2, num_keys2,
        num_buckets=num_buckets, max_distance=max_distance,
    )
    assert bias2.shape == (1, num_heads, num_queries2, num_keys2)
    assert jnp.allclose(bias2, ref2, atol=1e-6), "mismatch vs reference (grid>1)"

    print("KERNEL_OK")
</pallas_src>

<mosaic_0001>
module attributes {stable_mosaic.version = 11 : i64} {
  func.func @_rpb_kernel(%arg0: i32, %arg1: memref<8x32xf32, #tpu.memory_space<vmem>>, %arg2: memref<8x128xf32, #tpu.memory_space<vmem>>) attributes {dimension_semantics = [#tpu.dimension_semantics<parallel>], iteration_bounds = array<i64: 1>, scalar_prefetch = 0 : i64, scratch_operands = 0 : i64, tpu.core_type = #tpu.core_type<tc>, window_params = [{pipeline_mode = #tpu.pipeline_mode<synchronous>, transform_indices = @transform_0, window_bounds = array<i64: 8, 32>}, {transform_indices = @transform_1, window_bounds = array<i64: 8, 128>}]} {
    %0 = tpu.iota {dimensions = array<i32: 1>} : vector<1x128xi32>
    %c1_i32 = arith.constant 1 : i32
    %1 = arith.addi %arg0, %c1_i32 : i32
    %c8_i32 = arith.constant 8 : i32
    %2 = arith.muli %1, %c8_i32 : i32
    %c-7_i32 = arith.constant -7 : i32
    %3 = arith.subi %c-7_i32, %2 : i32
    %4 = vector.broadcast %3 : i32 to vector<1x128xi32>
    %5 = arith.addi %0, %4 : vector<1x128xi32>
    %c0_i32 = arith.constant 0 : i32
    %6 = vector.broadcast %c0_i32 : i32 to vector<1x128xi32>
    %7 = arith.cmpi sge, %5, %6 : vector<1x128xi32>
    %c16_i32 = arith.constant 16 : i32
    %c0_i32_0 = arith.constant 0 : i32
    %8 = vector.broadcast %c16_i32 : i32 to vector<1x128xi32>
    %9 = vector.broadcast %c0_i32_0 : i32 to vector<1x128xi32>
    %10 = arith.select %7, %8, %9 : vector<1x128xi1>, vector<1x128xi32>
    %11 = math.absi %5 : vector<1x128xi32>
    %c8_i32_1 = arith.constant 8 : i32
    %12 = vector.broadcast %c8_i32_1 : i32 to vector<1x128xi32>
    %13 = arith.cmpi slt, %11, %12 : vector<1x128xi32>
    %c8_i32_2 = arith.constant 8 : i32
    %14 = vector.broadcast %c8_i32_2 : i32 to vector<1x128xi32>
    %15 = arith.maxsi %11, %14 : vector<1x128xi32>
    %16 = arith.sitofp %15 : vector<1x128xi32> to vector<1x128xf32>
    %cst = arith.constant 8.000000e+00 : f32
    %17 = vector.broadcast %cst : f32 to vector<1x128xf32>
    %18 = arith.divf %16, %17 : vector<1x128xf32>
    %19 = math.log %18 : vector<1x128xf32>
    %cst_3 = arith.constant 2.07944155 : f32
    %20 = vector.broadcast %cst_3 : f32 to vector<1x128xf32>
    %21 = arith.divf %19, %20 : vector<1x128xf32>
    %cst_4 = arith.constant 8.000000e+00 : f32
    %22 = vector.broadcast %cst_4 : f32 to vector<1x128xf32>
    %23 = arith.mulf %21, %22 : vector<1x128xf32>
    %24 = arith.fptosi %23 : vector<1x128xf32> to vector<1x128xi32>
    %c8_i32_5 = arith.constant 8 : i32
    %25 = vector.broadcast %c8_i32_5 : i32 to vector<1x128xi32>
    %26 = arith.addi %25, %24 : vector<1x128xi32>
    %c15_i32 = arith.constant 15 : i32
    %27 = vector.broadcast %c15_i32 : i32 to vector<1x128xi32>
    %28 = arith.minsi %26, %27 : vector<1x128xi32>
    %29 = arith.select %13, %11, %28 : vector<1x128xi1>, vector<1x128xi32>
    %30 = arith.addi %10, %29 : vector<1x128xi32>
    %c0 = arith.constant 0 : index
    %c0_6 = arith.constant 0 : index
    %31 = vector.load %arg1[%c0, %c0_6] : memref<8x32xf32, #tpu.memory_space<vmem>>, vector<8x32xf32>
    %cst_7 = arith.constant 0.000000e+00 : f32
    %32 = vector.broadcast %cst_7 : f32 to vector<8x128xf32>
    %c0_i32_8 = arith.constant 0 : i32
    %33 = vector.broadcast %c0_i32_8 : i32 to vector<1x128xi32>
    %34 = arith.cmpi eq, %30, %33 : vector<1x128xi32>
    %35 = vector.extract_strided_slice %31 {offsets = [0, 0], sizes = [8, 1], strides = [1, 1]} : vector<8x32xf32> to vector<8x1xf32>
    %36 = vector.shape_cast %34 : vector<1x128xi1> to vector<1x128xi1>
    %37 = vector.broadcast %36 : vector<1x128xi1> to vector<8x128xi1>
    %38 = vector.shape_cast %35 : vector<8x1xf32> to vector<8x1xf32>
    %39 = vector.broadcast %38 : vector<8x1xf32> to vector<8x128xf32>
    %40 = arith.select %37, %39, %32 : vector<8x128xi1>, vector<8x128xf32>
    %c1_i32_9 = arith.constant 1 : i32
    %41 = vector.broadcast %c1_i32_9 : i32 to vector<1x128xi32>
    %42 = arith.cmpi eq, %30, %41 : vector<1x128xi32>
    %43 = vector.extract_strided_slice %31 {offsets = [0, 1], sizes = [8, 1], strides = [1, 1]} : vector<8x32xf32> to vector<8x1xf32>
    %44 = vector.shape_cast %42 : vector<1x128xi1> to vector<1x128xi1>
    %45 = vector.broadcast %44 : vector<1x128xi1> to vector<8x128xi1>
    %46 = vector.shape_cast %43 : vector<8x1xf32> to vector<8x1xf32>
    %47 = vector.broadcast %46 : vector<8x1xf32> to vector<8x128xf32>
    %48 = arith.select %45, %47, %40 : vector<8x128xi1>, vector<8x128xf32>
    %c2_i32 = arith.constant 2 : i32
    %49 = vector.broadcast %c2_i32 : i32 to vector<1x128xi32>
    %50 = arith.cmpi eq, %30, %49 : vector<1x128xi32>
    %51 = vector.extract_strided_slice %31 {offsets = [0, 2], sizes = [8, 1], strides = [1, 1]} : vector<8x32xf32> to vector<8x1xf32>
    %52 = vector.shape_cast %50 : vector<1x128xi1> to vector<1x128xi1>
    %53 = vector.broadcast %52 : vector<1x128xi1> to vector<8x128xi1>
    %54 = vector.shape_cast %51 : vector<8x1xf32> to vector<8x1xf32>
    %55 = vector.broadcast %54 : vector<8x1xf32> to vector<8x128xf32>
    %56 = arith.select %53, %55, %48 : vector<8x128xi1>, vector<8x128xf32>
    %c3_i32 = arith.constant 3 : i32
    %57 = vector.broadcast %c3_i32 : i32 to vector<1x128xi32>
    %58 = arith.cmpi eq, %30, %57 : vector<1x128xi32>
    %59 = vector.extract_strided_slice %31 {offsets = [0, 3], sizes = [8, 1], strides = [1, 1]} : vector<8x32xf32> to vector<8x1xf32>
    %60 = vector.shape_cast %58 : vector<1x128xi1> to vector<1x128xi1>
    %61 = vector.broadcast %60 : vector<1x128xi1> to vector<8x128xi1>
    %62 = vector.shape_cast %59 : vector<8x1xf32> to vector<8x1xf32>
    %63 = vector.broadcast %62 : vector<8x1xf32> to vector<8x128xf32>
    %64 = arith.select %61, %63, %56 : vector<8x128xi1>, vector<8x128xf32>
    %c4_i32 = arith.constant 4 : i32
    %65 = vector.broadcast %c4_i32 : i32 to vector<1x128xi32>
    %66 = arith.cmpi eq, %30, %65 : vector<1x128xi32>
    %67 = vector.extract_strided_slice %31 {offsets = [0, 4], sizes = [8, 1], strides = [1, 1]} : vector<8x32xf32> to vector<8x1xf32>
    %68 = vector.shape_cast %66 : vector<1x128xi1> to vector<1x128xi1>
    %69 = vector.broadcast %68 : vector<1x128xi1> to vector<8x128xi1>
    %70 = vector.shape_cast %67 : vector<8x1xf32> to vector<8x1xf32>
    %71 = vector.broadcast %70 : vector<8x1xf32> to vector<8x128xf32>
    %72 = arith.select %69, %71, %64 : vector<8x128xi1>, vector<8x128xf32>
    %c5_i32 = arith.constant 5 : i32
    %73 = vector.broadcast %c5_i32 : i32 to vector<1x128xi32>
    %74 = arith.cmpi eq, %30, %73 : vector<1x128xi32>
    %75 = vector.extract_strided_slice %31 {offsets = [0, 5], sizes = [8, 1], strides = [1, 1]} : vector<8x32xf32> to vector<8x1xf32>
    %76 = vector.shape_cast %74 : vector<1x128xi1> to vector<1x128xi1>
    %77 = vector.broadcast %76 : vector<1x128xi1> to vector<8x128xi1>
    %78 = vector.shape_cast %75 : vector<8x1xf32> to vector<8x1xf32>
    %79 = vector.broadcast %78 : vector<8x1xf32> to vector<8x128xf32>
    %80 = arith.select %77, %79, %72 : vector<8x128xi1>, vector<8x128xf32>
    %c6_i32 = arith.constant 6 : i32
    %81 = vector.broadcast %c6_i32 : i32 to vector<1x128xi32>
    %82 = arith.cmpi eq, %30, %81 : vector<1x128xi32>
    %83 = vector.extract_strided_slice %31 {offsets = [0, 6], sizes = [8, 1], strides = [1, 1]} : vector<8x32xf32> to vector<8x1xf32>
    %84 = vector.shape_cast %82 : vector<1x128xi1> to vector<1x128xi1>
    %85 = vector.broadcast %84 : vector<1x128xi1> to vector<8x128xi1>
    %86 = vector.shape_cast %83 : vector<8x1xf32> to vector<8x1xf32>
    %87 = vector.broadcast %86 : vector<8x1xf32> to vector<8x128xf32>
    %88 = arith.select %85, %87, %80 : vector<8x128xi1>, vector<8x128xf32>
    %c7_i32 = arith.constant 7 : i32
    %89 = vector.broadcast %c7_i32 : i32 to vector<1x128xi32>
    %90 = arith.cmpi eq, %30, %89 : vector<1x128xi32>
    %91 = vector.extract_strided_slice %31 {offsets = [0, 7], sizes = [8, 1], strides = [1, 1]} : vector<8x32xf32> to vector<8x1xf32>
    %92 = vector.shape_cast %90 : vector<1x128xi1> to vector<1x128xi1>
    %93 = vector.broadcast %92 : vector<1x128xi1> to vector<8x128xi1>
    %94 = vector.shape_cast %91 : vector<8x1xf32> to vector<8x1xf32>
    %95 = vector.broadcast %94 : vector<8x1xf32> to vector<8x128xf32>
    %96 = arith.select %93, %95, %88 : vector<8x128xi1>, vector<8x128xf32>
    %c8_i32_10 = arith.constant 8 : i32
    %97 = vector.broadcast %c8_i32_10 : i32 to vector<1x128xi32>
    %98 = arith.cmpi eq, %30, %97 : vector<1x128xi32>
    %99 = vector.extract_strided_slice %31 {offsets = [0, 8], sizes = [8, 1], strides = [1, 1]} : vector<8x32xf32> to vector<8x1xf32>
    %100 = vector.shape_cast %98 : vector<1x128xi1> to vector<1x128xi1>
    %101 = vector.broadcast %100 : vector<1x128xi1> to vector<8x128xi1>
    %102 = vector.shape_cast %99 : vector<8x1xf32> to vector<8x1xf32>
    %103 = vector.broadcast %102 : vector<8x1xf32> to vector<8x128xf32>
    %104 = arith.select %101, %103, %96 : vector<8x128xi1>, vector<8x128xf32>
    %c9_i32 = arith.constant 9 : i32
    %105 = vector.broadcast %c9_i32 : i32 to vector<1x128xi32>
    %106 = arith.cmpi eq, %30, %105 : vector<1x128xi32>
    %107 = vector.extract_strided_slice %31 {offsets = [0, 9], sizes = [8, 1], strides = [1, 1]} : vector<8x32xf32> to vector<8x1xf32>
    %108 = vector.shape_cast %106 : vector<1x128xi1> to vector<1x128xi1>
    %109 = vector.broadcast %108 : vector<1x128xi1> to vector<8x128xi1>
    %110 = vector.shape_cast %107 : vector<8x1xf32> to vector<8x1xf32>
    %111 = vector.broadcast %110 : vector<8x1xf32> to vector<8x128xf32>
    %112 = arith.select %109, %111, %104 : vector<8x128xi1>, vector<8x128xf32>
    %c10_i32 = arith.constant 10 : i32
    %113 = vector.broadcast %c10_i32 : i32 to vector<1x128xi32>
    %114 = arith.cmpi eq, %30, %113 : vector<1x128xi32>
    %115 = vector.extract_strided_slice %31 {offsets = [0, 10], sizes = [8, 1], strides = [1, 1]} : vector<8x32xf32> to vector<8x1xf32>
    %116 = vector.shape_cast %114 : vector<1x128xi1> to vector<1x128xi1>
    %117 = vector.broadcast %116 : vector<1x128xi1> to vector<8x128xi1>
    %118 = vector.shape_cast %115 : vector<8x1xf32> to vector<8x1xf32>
    %119 = vector.broadcast %118 : vector<8x1xf32> to vector<8x128xf32>
    %120 = arith.select %117, %119, %112 : vector<8x128xi1>, vector<8x128xf32>
    %c11_i32 = arith.constant 11 : i32
    %121 = vector.broadcast %c11_i32 : i32 to vector<1x128xi32>
    %122 = arith.cmpi eq, %30, %121 : vector<1x128xi32>
    %123 = vector.extract_strided_slice %31 {offsets = [0, 11], sizes = [8, 1], strides = [1, 1]} : vector<8x32xf32> to vector<8x1xf32>
    %124 = vector.shape_cast %122 : vector<1x128xi1> to vector<1x128xi1>
    %125 = vector.broadcast %124 : vector<1x128xi1> to vector<8x128xi1>
    %126 = vector.shape_cast %123 : vector<8x1xf32> to vector<8x1xf32>
    %127 = vector.broadcast %126 : vector<8x1xf32> to vector<8x128xf32>
    %128 = arith.select %125, %127, %120 : vector<8x128xi1>, vector<8x128xf32>
    %c12_i32 = arith.constant 12 : i32
    %129 = vector.broadcast %c12_i32 : i32 to vector<1x128xi32>
    %130 = arith.cmpi eq, %30, %129 : vector<1x128xi32>
    %131 = vector.extract_strided_slice %31 {offsets = [0, 12], sizes = [8, 1], strides = [1, 1]} : vector<8x32xf32> to vector<8x1xf32>
    %132 = vector.shape_cast %130 : vector<1x128xi1> to vector<1x128xi1>
    %133 = vector.broadcast %132 : vector<1x128xi1> to vector<8x128xi1>
    %134 = vector.shape_cast %131 : vector<8x1xf32> to vector<8x1xf32>
    %135 = vector.broadcast %134 : vector<8x1xf32> to vector<8x128xf32>
    %136 = arith.select %133, %135, %128 : vector<8x128xi1>, vector<8x128xf32>
    %c13_i32 = arith.constant 13 : i32
    %137 = vector.broadcast %c13_i32 : i32 to vector<1x128xi32>
    %138 = arith.cmpi eq, %30, %137 : vector<1x128xi32>
    %139 = vector.extract_strided_slice %31 {offsets = [0, 13], sizes = [8, 1], strides = [1, 1]} : vector<8x32xf32> to vector<8x1xf32>
    %140 = vector.shape_cast %138 : vector<1x128xi1> to vector<1x128xi1>
    %141 = vector.broadcast %140 : vector<1x128xi1> to vector<8x128xi1>
    %142 = vector.shape_cast %139 : vector<8x1xf32> to vector<8x1xf32>
    %143 = vector.broadcast %142 : vector<8x1xf32> to vector<8x128xf32>
    %144 = arith.select %141, %143, %136 : vector<8x128xi1>, vector<8x128xf32>
    %c14_i32 = arith.constant 14 : i32
    %145 = vector.broadcast %c14_i32 : i32 to vector<1x128xi32>
    %146 = arith.cmpi eq, %30, %145 : vector<1x128xi32>
    %147 = vector.extract_strided_slice %31 {offsets = [0, 14], sizes = [8, 1], strides = [1, 1]} : vector<8x32xf32> to vector<8x1xf32>
    %148 = vector.shape_cast %146 : vector<1x128xi1> to vector<1x128xi1>
    %149 = vector.broadcast %148 : vector<1x128xi1> to vector<8x128xi1>
    %150 = vector.shape_cast %147 : vector<8x1xf32> to vector<8x1xf32>
    %151 = vector.broadcast %150 : vector<8x1xf32> to vector<8x128xf32>
    %152 = arith.select %149, %151, %144 : vector<8x128xi1>, vector<8x128xf32>
    %c15_i32_11 = arith.constant 15 : i32
    %153 = vector.broadcast %c15_i32_11 : i32 to vector<1x128xi32>
    %154 = arith.cmpi eq, %30, %153 : vector<1x128xi32>
    %155 = vector.extract_strided_slice %31 {offsets = [0, 15], sizes = [8, 1], strides = [1, 1]} : vector<8x32xf32> to vector<8x1xf32>
    %156 = vector.shape_cast %154 : vector<1x128xi1> to vector<1x128xi1>
    %157 = vector.broadcast %156 : vector<1x128xi1> to vector<8x128xi1>
    %158 = vector.shape_cast %155 : vector<8x1xf32> to vector<8x1xf32>
    %159 = vector.broadcast %158 : vector<8x1xf32> to vector<8x128xf32>
    %160 = arith.select %157, %159, %152 : vector<8x128xi1>, vector<8x128xf32>
    %c16_i32_12 = arith.constant 16 : i32
    %161 = vector.broadcast %c16_i32_12 : i32 to vector<1x128xi32>
    %162 = arith.cmpi eq, %30, %161 : vector<1x128xi32>
    %163 = vector.extract_strided_slice %31 {offsets = [0, 16], sizes = [8, 1], strides = [1, 1]} : vector<8x32xf32> to vector<8x1xf32>
    %164 = vector.shape_cast %162 : vector<1x128xi1> to vector<1x128xi1>
    %165 = vector.broadcast %164 : vector<1x128xi1> to vector<8x128xi1>
    %166 = vector.shape_cast %163 : vector<8x1xf32> to vector<8x1xf32>
    %167 = vector.broadcast %166 : vector<8x1xf32> to vector<8x128xf32>
    %168 = arith.select %165, %167, %160 : vector<8x128xi1>, vector<8x128xf32>
    %c17_i32 = arith.constant 17 : i32
    %169 = vector.broadcast %c17_i32 : i32 to vector<1x128xi32>
    %170 = arith.cmpi eq, %30, %169 : vector<1x128xi32>
    %171 = vector.extract_strided_slice %31 {offsets = [0, 17], sizes = [8, 1], strides = [1, 1]} : vector<8x32xf32> to vector<8x1xf32>
    %172 = vector.shape_cast %170 : vector<1x128xi1> to vector<1x128xi1>
    %173 = vector.broadcast %172 : vector<1x128xi1> to vector<8x128xi1>
    %174 = vector.shape_cast %171 : vector<8x1xf32> to vector<8x1xf32>
    %175 = vector.broadcast %174 : vector<8x1xf32> to vector<8x128xf32>
    %176 = arith.select %173, %175, %168 : vector<8x128xi1>, vector<8x128xf32>
    %c18_i32 = arith.constant 18 : i32
    %177 = vector.broadcast %c18_i32 : i32 to vector<1x128xi32>
    %178 = arith.cmpi eq, %30, %177 : vector<1x128xi32>
    %179 = vector.extract_strided_slice %31 {offsets = [0, 18], sizes = [8, 1], strides = [1, 1]} : vector<8x32xf32> to vector<8x1xf32>
    %180 = vector.shape_cast %178 : vector<1x128xi1> to vector<1x128xi1>
    %181 = vector.broadcast %180 : vector<1x128xi1> to vector<8x128xi1>
    %182 = vector.shape_cast %179 : vector<8x1xf32> to vector<8x1xf32>
    %183 = vector.broadcast %182 : vector<8x1xf32> to vector<8x128xf32>
    %184 = arith.select %181, %183, %176 : vector<8x128xi1>, vector<8x128xf32>
    %c19_i32 = arith.constant 19 : i32
    %185 = vector.broadcast %c19_i32 : i32 to vector<1x128xi32>
    %186 = arith.cmpi eq, %30, %185 : vector<1x128xi32>
    %187 = vector.extract_strided_slice %31 {offsets = [0, 19], sizes = [8, 1], strides = [1, 1]} : vector<8x32xf32> to vector<8x1xf32>
    %188 = vector.shape_cast %186 : vector<1x128xi1> to vector<1x128xi1>
    %189 = vector.broadcast %188 : vector<1x128xi1> to vector<8x128xi1>
    %190 = vector.shape_cast %187 : vector<8x1xf32> to vector<8x1xf32>
    %191 = vector.broadcast %190 : vector<8x1xf32> to vector<8x128xf32>
    %192 = arith.select %189, %191, %184 : vector<8x128xi1>, vector<8x128xf32>
    %c20_i32 = arith.constant 20 : i32
    %193 = vector.broadcast %c20_i32 : i32 to vector<1x128xi32>
    %194 = arith.cmpi eq, %30, %193 : vector<1x128xi32>
    %195 = vector.extract_strided_slice %31 {offsets = [0, 20], sizes = [8, 1], strides = [1, 1]} : vector<8x32xf32> to vector<8x1xf32>
    %196 = vector.shape_cast %194 : vector<1x128xi1> to vector<1x128xi1>
    %197 = vector.broadcast %196 : vector<1x128xi1> to vector<8x128xi1>
    %198 = vector.shape_cast %195 : vector<8x1xf32> to vector<8x1xf32>
    %199 = vector.broadcast %198 : vector<8x1xf32> to vector<8x128xf32>
    %200 = arith.select %197, %199, %192 : vector<8x128xi1>, vector<8x128xf32>
    %c21_i32 = arith.constant 21 : i32
    %201 = vector.broadcast %c21_i32 : i32 to vector<1x128xi32>
    %202 = arith.cmpi eq, %30, %201 : vector<1x128xi32>
    %203 = vector.extract_strided_slice %31 {offsets = [0, 21], sizes = [8, 1], strides = [1, 1]} : vector<8x32xf32> to vector<8x1xf32>
    %204 = vector.shape_cast %202 : vector<1x128xi1> to vector<1x128xi1>
    %205 = vector.broadcast %204 : vector<1x128xi1> to vector<8x128xi1>
    %206 = vector.shape_cast %203 : vector<8x1xf32> to vector<8x1xf32>
    %207 = vector.broadcast %206 : vector<8x1xf32> to vector<8x128xf32>
    %208 = arith.select %205, %207, %200 : vector<8x128xi1>, vector<8x128xf32>
    %c22_i32 = arith.constant 22 : i32
    %209 = vector.broadcast %c22_i32 : i32 to vector<1x128xi32>
    %210 = arith.cmpi eq, %30, %209 : vector<1x128xi32>
    %211 = vector.extract_strided_slice %31 {offsets = [0, 22], sizes = [8, 1], strides = [1, 1]} : vector<8x32xf32> to vector<8x1xf32>
    %212 = vector.shape_cast %210 : vector<1x128xi1> to vector<1x128xi1>
    %213 = vector.broadcast %212 : vector<1x128xi1> to vector<8x128xi1>
    %214 = vector.shape_cast %211 : vector<8x1xf32> to vector<8x1xf32>
    %215 = vector.broadcast %214 : vector<8x1xf32> to vector<8x128xf32>
    %216 = arith.select %213, %215, %208 : vector<8x128xi1>, vector<8x128xf32>
    %c23_i32 = arith.constant 23 : i32
    %217 = vector.broadcast %c23_i32 : i32 to vector<1x128xi32>
    %218 = arith.cmpi eq, %30, %217 : vector<1x128xi32>
    %219 = vector.extract_strided_slice %31 {offsets = [0, 23], sizes = [8, 1], strides = [1, 1]} : vector<8x32xf32> to vector<8x1xf32>
    %220 = vector.shape_cast %218 : vector<1x128xi1> to vector<1x128xi1>
    %221 = vector.broadcast %220 : vector<1x128xi1> to vector<8x128xi1>
    %222 = vector.shape_cast %219 : vector<8x1xf32> to vector<8x1xf32>
    %223 = vector.broadcast %222 : vector<8x1xf32> to vector<8x128xf32>
    %224 = arith.select %221, %223, %216 : vector<8x128xi1>, vector<8x128xf32>
    %c24_i32 = arith.constant 24 : i32
    %225 = vector.broadcast %c24_i32 : i32 to vector<1x128xi32>
    %226 = arith.cmpi eq, %30, %225 : vector<1x128xi32>
    %227 = vector.extract_strided_slice %31 {offsets = [0, 24], sizes = [8, 1], strides = [1, 1]} : vector<8x32xf32> to vector<8x1xf32>
    %228 = vector.shape_cast %226 : vector<1x128xi1> to vector<1x128xi1>
    %229 = vector.broadcast %228 : vector<1x128xi1> to vector<8x128xi1>
    %230 = vector.shape_cast %227 : vector<8x1xf32> to vector<8x1xf32>
    %231 = vector.broadcast %230 : vector<8x1xf32> to vector<8x128xf32>
    %232 = arith.select %229, %231, %224 : vector<8x128xi1>, vector<8x128xf32>
    %c25_i32 = arith.constant 25 : i32
    %233 = vector.broadcast %c25_i32 : i32 to vector<1x128xi32>
    %234 = arith.cmpi eq, %30, %233 : vector<1x128xi32>
    %235 = vector.extract_strided_slice %31 {offsets = [0, 25], sizes = [8, 1], strides = [1, 1]} : vector<8x32xf32> to vector<8x1xf32>
    %236 = vector.shape_cast %234 : vector<1x128xi1> to vector<1x128xi1>
    %237 = vector.broadcast %236 : vector<1x128xi1> to vector<8x128xi1>
    %238 = vector.shape_cast %235 : vector<8x1xf32> to vector<8x1xf32>
    %239 = vector.broadcast %238 : vector<8x1xf32> to vector<8x128xf32>
    %240 = arith.select %237, %239, %232 : vector<8x128xi1>, vector<8x128xf32>
    %c26_i32 = arith.constant 26 : i32
    %241 = vector.broadcast %c26_i32 : i32 to vector<1x128xi32>
    %242 = arith.cmpi eq, %30, %241 : vector<1x128xi32>
    %243 = vector.extract_strided_slice %31 {offsets = [0, 26], sizes = [8, 1], strides = [1, 1]} : vector<8x32xf32> to vector<8x1xf32>
    %244 = vector.shape_cast %242 : vector<1x128xi1> to vector<1x128xi1>
    %245 = vector.broadcast %244 : vector<1x128xi1> to vector<8x128xi1>
    %246 = vector.shape_cast %243 : vector<8x1xf32> to vector<8x1xf32>
    %247 = vector.broadcast %246 : vector<8x1xf32> to vector<8x128xf32>
    %248 = arith.select %245, %247, %240 : vector<8x128xi1>, vector<8x128xf32>
    %c27_i32 = arith.constant 27 : i32
    %249 = vector.broadcast %c27_i32 : i32 to vector<1x128xi32>
    %250 = arith.cmpi eq, %30, %249 : vector<1x128xi32>
    %251 = vector.extract_strided_slice %31 {offsets = [0, 27], sizes = [8, 1], strides = [1, 1]} : vector<8x32xf32> to vector<8x1xf32>
    %252 = vector.shape_cast %250 : vector<1x128xi1> to vector<1x128xi1>
    %253 = vector.broadcast %252 : vector<1x128xi1> to vector<8x128xi1>
    %254 = vector.shape_cast %251 : vector<8x1xf32> to vector<8x1xf32>
    %255 = vector.broadcast %254 : vector<8x1xf32> to vector<8x128xf32>
    %256 = arith.select %253, %255, %248 : vector<8x128xi1>, vector<8x128xf32>
    %c28_i32 = arith.constant 28 : i32
    %257 = vector.broadcast %c28_i32 : i32 to vector<1x128xi32>
    %258 = arith.cmpi eq, %30, %257 : vector<1x128xi32>
    %259 = vector.extract_strided_slice %31 {offsets = [0, 28], sizes = [8, 1], strides = [1, 1]} : vector<8x32xf32> to vector<8x1xf32>
    %260 = vector.shape_cast %258 : vector<1x128xi1> to vector<1x128xi1>
    %261 = vector.broadcast %260 : vector<1x128xi1> to vector<8x128xi1>
    %262 = vector.shape_cast %259 : vector<8x1xf32> to vector<8x1xf32>
    %263 = vector.broadcast %262 : vector<8x1xf32> to vector<8x128xf32>
    %264 = arith.select %261, %263, %256 : vector<8x128xi1>, vector<8x128xf32>
    %c29_i32 = arith.constant 29 : i32
    %265 = vector.broadcast %c29_i32 : i32 to vector<1x128xi32>
    %266 = arith.cmpi eq, %30, %265 : vector<1x128xi32>
    %267 = vector.extract_strided_slice %31 {offsets = [0, 29], sizes = [8, 1], strides = [1, 1]} : vector<8x32xf32> to vector<8x1xf32>
    %268 = vector.shape_cast %266 : vector<1x128xi1> to vector<1x128xi1>
    %269 = vector.broadcast %268 : vector<1x128xi1> to vector<8x128xi1>
    %270 = vector.shape_cast %267 : vector<8x1xf32> to vector<8x1xf32>
    %271 = vector.broadcast %270 : vector<8x1xf32> to vector<8x128xf32>
    %272 = arith.select %269, %271, %264 : vector<8x128xi1>, vector<8x128xf32>
    %c30_i32 = arith.constant 30 : i32
    %273 = vector.broadcast %c30_i32 : i32 to vector<1x128xi32>
    %274 = arith.cmpi eq, %30, %273 : vector<1x128xi32>
    %275 = vector.extract_strided_slice %31 {offsets = [0, 30], sizes = [8, 1], strides = [1, 1]} : vector<8x32xf32> to vector<8x1xf32>
    %276 = vector.shape_cast %274 : vector<1x128xi1> to vector<1x128xi1>
    %277 = vector.broadcast %276 : vector<1x128xi1> to vector<8x128xi1>
    %278 = vector.shape_cast %275 : vector<8x1xf32> to vector<8x1xf32>
    %279 = vector.broadcast %278 : vector<8x1xf32> to vector<8x128xf32>
    %280 = arith.select %277, %279, %272 : vector<8x128xi1>, vector<8x128xf32>
    %c31_i32 = arith.constant 31 : i32
    %281 = vector.broadcast %c31_i32 : i32 to vector<1x128xi32>
    %282 = arith.cmpi eq, %30, %281 : vector<1x128xi32>
    %283 = vector.extract_strided_slice %31 {offsets = [0, 31], sizes = [8, 1], strides = [1, 1]} : vector<8x32xf32> to vector<8x1xf32>
    %284 = vector.shape_cast %282 : vector<1x128xi1> to vector<1x128xi1>
    %285 = vector.broadcast %284 : vector<1x128xi1> to vector<8x128xi1>
    %286 = vector.shape_cast %283 : vector<8x1xf32> to vector<8x1xf32>
    %287 = vector.broadcast %286 : vector<8x1xf32> to vector<8x128xf32>
    %288 = arith.select %285, %287, %280 : vector<8x128xi1>, vector<8x128xf32>
    %289 = vector.extract_strided_slice %288 {offsets = [0, 7], sizes = [8, 16], strides = [1, 1]} : vector<8x128xf32> to vector<8x16xf32>
    %c0_13 = arith.constant 0 : index
    %c0_14 = arith.constant 0 : index
    %290 = vector.load %arg2[%c0_13, %c0_14] : memref<8x128xf32, #tpu.memory_space<vmem>>, vector<8x16xf32>
    tpu.vector_store %arg2[%c0_13, %c0_14], %289 {strides = array<i32>} : memref<8x128xf32, #tpu.memory_space<vmem>>, vector<8x16xf32>,
    %291 = vector.extract_strided_slice %288 {offsets = [0, 6], sizes = [8, 16], strides = [1, 1]} : vector<8x128xf32> to vector<8x16xf32>
    %c0_15 = arith.constant 0 : index
    %c16 = arith.constant 16 : index
    %292 = vector.load %arg2[%c0_15, %c16] : memref<8x128xf32, #tpu.memory_space<vmem>>, vector<8x16xf32>
    tpu.vector_store %arg2[%c0_15, %c16], %291 {strides = array<i32>} : memref<8x128xf32, #tpu.memory_space<vmem>>, vector<8x16xf32>,
    %293 = vector.extract_strided_slice %288 {offsets = [0, 5], sizes = [8, 16], strides = [1, 1]} : vector<8x128xf32> to vector<8x16xf32>
    %c0_16 = arith.constant 0 : index
    %c32 = arith.constant 32 : index
    %294 = vector.load %arg2[%c0_16, %c32] : memref<8x128xf32, #tpu.memory_space<vmem>>, vector<8x16xf32>
    tpu.vector_store %arg2[%c0_16, %c32], %293 {strides = array<i32>} : memref<8x128xf32, #tpu.memory_space<vmem>>, vector<8x16xf32>,
    %295 = vector.extract_strided_slice %288 {offsets = [0, 4], sizes = [8, 16], strides = [1, 1]} : vector<8x128xf32> to vector<8x16xf32>
    %c0_17 = arith.constant 0 : index
    %c48 = arith.constant 48 : index
    %296 = vector.load %arg2[%c0_17, %c48] : memref<8x128xf32, #tpu.memory_space<vmem>>, vector<8x16xf32>
    tpu.vector_store %arg2[%c0_17, %c48], %295 {strides = array<i32>} : memref<8x128xf32, #tpu.memory_space<vmem>>, vector<8x16xf32>,
    %297 = vector.extract_strided_slice %288 {offsets = [0, 3], sizes = [8, 16], strides = [1, 1]} : vector<8x128xf32> to vector<8x16xf32>
    %c0_18 = arith.constant 0 : index
    %c64 = arith.constant 64 : index
    %298 = vector.load %arg2[%c0_18, %c64] : memref<8x128xf32, #tpu.memory_space<vmem>>, vector<8x16xf32>
    tpu.vector_store %arg2[%c0_18, %c64], %297 {strides = array<i32>} : memref<8x128xf32, #tpu.memory_space<vmem>>, vector<8x16xf32>,
    %299 = vector.extract_strided_slice %288 {offsets = [0, 2], sizes = [8, 16], strides = [1, 1]} : vector<8x128xf32> to vector<8x16xf32>
    %c0_19 = arith.constant 0 : index
    %c80 = arith.constant 80 : index
    %300 = vector.load %arg2[%c0_19, %c80] : memref<8x128xf32, #tpu.memory_space<vmem>>, vector<8x16xf32>
    tpu.vector_store %arg2[%c0_19, %c80], %299 {strides = array<i32>} : memref<8x128xf32, #tpu.memory_space<vmem>>, vector<8x16xf32>,
    %301 = vector.extract_strided_slice %288 {offsets = [0, 1], sizes = [8, 16], strides = [1, 1]} : vector<8x128xf32> to vector<8x16xf32>
    %c0_20 = arith.constant 0 : index
    %c96 = arith.constant 96 : index
    %302 = vector.load %arg2[%c0_20, %c96] : memref<8x128xf32, #tpu.memory_space<vmem>>, vector<8x16xf32>
    tpu.vector_store %arg2[%c0_20, %c96], %301 {strides = array<i32>} : memref<8x128xf32, #tpu.memory_space<vmem>>, vector<8x16xf32>,
    %303 = vector.extract_strided_slice %288 {offsets = [0, 0], sizes = [8, 16], strides = [1, 1]} : vector<8x128xf32> to vector<8x16xf32>
    %c0_21 = arith.constant 0 : index
    %c112 = arith.constant 112 : index
    %304 = vector.load %arg2[%c0_21, %c112] : memref<8x128xf32, #tpu.memory_space<vmem>>, vector<8x16xf32>
    tpu.vector_store %arg2[%c0_21, %c112], %303 {strides = array<i32>} : memref<8x128xf32, #tpu.memory_space<vmem>>, vector<8x16xf32>,
    return
  }
  func.func @transform_0(%arg0: i32) -> (i32, i32) {
    %c0_i32 = arith.constant 0 : i32
    %c0_i32_0 = arith.constant 0 : i32
    %c0_i32_1 = arith.constant 0 : i32
    return %c0_i32, %c0_i32_0 : i32, i32
  }
  func.func @transform_1(%arg0: i32) -> (i32, i32) {
    %c0_i32 = arith.constant 0 : i32
    %c0_i32_0 = arith.constant 0 : i32
    return %c0_i32, %arg0 : i32, i32
  }
}

</mosaic_0001>

<llo_original>
// kernel: tpu_custom_call.1
$region0: #{tpu_custom_call.1}
  #allocation0 [shape = 'u32[]', space=smem, size = 0x4, offset = 0x4, fixed_abs, tag = 'smem constant byte address 0x4 - core index']
  #allocation1 [shape = 'u32[144,128]{1,0:T(1,128)}', space=vmem, size = 0x12000, scoped, tag = 'internal scratch']
  %s0 = inlined_call_operand.hbm [shape: f32[8,32], index: 0, kind: input, shape index: {}]
  %s1 = inlined_call_operand.hbm [shape: f32[8,128], index: 1, kind: output, shape index: {}]
  %s2 = sld [smem:[#allocation0]]
  $region18: #{tpu_custom_call.1} parent=0
    _
  %s4 = ssub.s32 1, %s2
  %s5 = scalar_select 0, %s4, %s2
  $region1: #{tpu_custom_call.1} parent=0
    #allocation2 [shape = 'u8[4096]{0}', space=vmem, size = 0x1000, scoped, tag = 'input window, operand 0, single buffered']
    #allocation3 [shape = 's32[1]{0}', space=sflag, size = 0x4, scoped, tag = 'scoped memory for tpu_custom_call.1']
    #allocation4 [shape = 's32[1]{0}', space=sflag, size = 0x4, scoped, tag = 'scoped memory for tpu_custom_call.1']
    #allocation5 [shape = 'u8[4096]{0}', space=vmem, size = 0x1000, scoped, tag = 'output window, operand 0, single buffered']
    %6 = vsyncpa [#allocation3], 0
    %7 = vsyncpa [#allocation4], 0
    // Predicated region
    $region2: #{tpu_custom_call.1} parent=1 // pred_check
      _
    $region3: #{tpu_custom_call.1} parent=1 // pred_check_branch
      %9 = sbr.rel (0) target = $region5
    $region4: #{tpu_custom_call.1} parent=1 // pred_region
      %s11 = ssub.s32 128, 128
      %12 = vsyncadd [#allocation3], %s11
      %s14 = sshll.u32 [#allocation2], 4
      %s15 = int_to_ptr.vmem [resolvable:$true] %s14
      %17 = dma.hbm_to_vmem [thread:$0]  %s0, 128, %s15, [#allocation3]
    $region5: #{tpu_custom_call.1} parent=1 // pred_fallthru
      _
    // Predicated region
    $region6: #{tpu_custom_call.1} parent=1 // pred_check
      _
    $region7: #{tpu_custom_call.1} parent=1 // pred_check_branch
      %19 = sbr.rel (0) target = $region9
    $region8: #{tpu_custom_call.1} parent=1 // pred_region
      %20 = dma.done [#allocation3], 128
    $region9: #{tpu_custom_call.1} parent=1 // pred_fallthru
      _
    %v21 = vlaneseq
    %v22 = vand.u32 %v21, 127
    %s23 = sadd.s32 0, 1
    %s24 = smul.u32 %s23, 8
    %s25 = ssub.s32 4294967289, %s24
    %v26 = vstv %s25
    %v27 = vadd.s32 %v22, %v26
    %vm28 = vcmp.ge.s32.totalorder %v27, 0
    %v29 = vsel %vm28, 16, 0
    %vm30 = vcmp.lt.s32.totalorder %v27, 0
    %v31 = vsub.s32 0, %v27
    %v32 = vsel %vm30, %v31, %v27
    %vm33 = vcmp.lt.s32.totalorder %v32, 8
    %vm34 = vcmp.gt.s32.totalorder %v32, 8
    %v35 = vsel %vm34, %v32, 8
    %v36 = vcvt.s32.f32 %v35
    %v37 = vrcp.pop 8.0
    %v38 = vmul.f32 %v36, %v37
    %v39 = vlog2.pop %v38
    %v40 = vmul.f32 %v39, 0.6931472
    %v41 = vrcp.pop 2.0794415
    %v42 = vmul.f32 %v40, %v41
    %v43 = vmul.f32 %v42, 8.0
    %v44 = vcvt.f32.s32.to.zero.pseudo %v43
    %v45 = vadd.s32 %v44, 8
    %vm46 = vcmp.lt.s32.totalorder %v45, 15
    %v47 = vsel %vm46, %v45, 15
    %v48 = vsel %vm33, %v32, %v47
    %v49 = vadd.s32 %v29, %v48
    %v50 = vld [vmem:[#allocation2] sm:$0xff]
    %vm51 = vcmp.eq.s32.totalorder %v49, 0
    %v52 = vsel %vm51, 1, 0
    %vm53 = vcmp.eq.s32.totalorder %v52, 1
    %55 = vset.pattern.permute.xlu0 0
    %56 = vperm.xlu0 %55, %v50
    %v57 = vpop.permute.xlu0 %56
    %v59 = vsel %vm53, %v57, 0.0
    %vm60 = vcmp.eq.s32.totalorder %v49, 1
    %v61 = vsel %vm60, 1, 0
    %vm62 = vcmp.eq.s32.totalorder %v61, 1
    %63 = vset.pattern.permute.xlu0 1
    %64 = vperm.xlu0 %63, %v50
    %v65 = vpop.permute.xlu0 %64
    %v67 = vsel %vm62, %v65, %v59
    %vm68 = vcmp.eq.s32.totalorder %v49, 2
    %v69 = vsel %vm68, 1, 0
    %vm70 = vcmp.eq.s32.totalorder %v69, 1
    %71 = vset.pattern.permute.xlu0 2
    %72 = vperm.xlu0 %71, %v50
    %v73 = vpop.permute.xlu0 %72
    %v75 = vsel %vm70, %v73, %v67
    %vm76 = vcmp.eq.s32.totalorder %v49, 3
    %v77 = vsel %vm76, 1, 0
    %vm78 = vcmp.eq.s32.totalorder %v77, 1
    %79 = vset.pattern.permute.xlu0 3
    %80 = vperm.xlu0 %79, %v50
    %v81 = vpop.permute.xlu0 %80
    %v83 = vsel %vm78, %v81, %v75
    %vm84 = vcmp.eq.s32.totalorder %v49, 4
    %v85 = vsel %vm84, 1, 0
    %vm86 = vcmp.eq.s32.totalorder %v85, 1
    %87 = vset.pattern.permute.xlu0 4
    %88 = vperm.xlu0 %87, %v50
    %v89 = vpop.permute.xlu0 %88
    %v91 = vsel %vm86, %v89, %v83
    %vm92 = vcmp.eq.s32.totalorder %v49, 5
    %v93 = vsel %vm92, 1, 0
    %vm94 = vcmp.eq.s32.totalorder %v93, 1
    %95 = vset.pattern.permute.xlu0 5
    %96 = vperm.xlu0 %95, %v50
    %v97 = vpop.permute.xlu0 %96
    %v99 = vsel %vm94, %v97, %v91
    %vm100 = vcmp.eq.s32.totalorder %v49, 6
    %v101 = vsel %vm100, 1, 0
    %vm102 = vcmp.eq.s32.totalorder %v101, 1
    %103 = vset.pattern.permute.xlu0 6
    %104 = vperm.xlu0 %103, %v50
    %v105 = vpop.permute.xlu0 %104
    %v107 = vsel %vm102, %v105, %v99
    %vm108 = vcmp.eq.s32.totalorder %v49, 7
    %v109 = vsel %vm108, 1, 0
    %vm110 = vcmp.eq.s32.totalorder %v109, 1
    %111 = vset.pattern.permute.xlu0 7
    %112 = vperm.xlu0 %111, %v50
    %v113 = vpop.permute.xlu0 %112
    %v115 = vsel %vm110, %v113, %v107
    %vm116 = vcmp.eq.s32.totalorder %v49, 8
    %v117 = vsel %vm116, 1, 0
    %vm118 = vcmp.eq.s32.totalorder %v117, 1
    %119 = vset.pattern.permute.xlu0 8
    %120 = vperm.xlu0 %119, %v50
    %v121 = vpop.permute.xlu0 %120
    %v123 = vsel %vm118, %v121, %v115
    %vm124 = vcmp.eq.s32.totalorder %v49, 9
    %v125 = vsel %vm124, 1, 0
    %vm126 = vcmp.eq.s32.totalorder %v125, 1
    %127 = vset.pattern.permute.xlu0 9
    %128 = vperm.xlu0 %127, %v50
    %v129 = vpop.permute.xlu0 %128
    %v131 = vsel %vm126, %v129, %v123
    %vm132 = vcmp.eq.s32.totalorder %v49, 10
    %v133 = vsel %vm132, 1, 0
    %vm134 = vcmp.eq.s32.totalorder %v133, 1
    %135 = vset.pattern.permute.xlu0 10
    %136 = vperm.xlu0 %135, %v50
    %v137 = vpop.permute.xlu0 %136
    %v139 = vsel %vm134, %v137, %v131
    %vm140 = vcmp.eq.s32.totalorder %v49, 11
    %v141 = vsel %vm140, 1, 0
    %vm142 = vcmp.eq.s32.totalorder %v141, 1
    %143 = vset.pattern.permute.xlu0 11
    %144 = vperm.xlu0 %143, %v50
    %v145 = vpop.permute.xlu0 %144
    %v147 = vsel %vm142, %v145, %v139
    %vm148 = vcmp.eq.s32.totalorder %v49, 12
    %v149 = vsel %vm148, 1, 0
    %vm150 = vcmp.eq.s32.totalorder %v149, 1
    %151 = vset.pattern.permute.xlu0 12
    %152 = vperm.xlu0 %151, %v50
    %v153 = vpop.permute.xlu0 %152
    %v155 = vsel %vm150, %v153, %v147
    %vm156 = vcmp.eq.s32.totalorder %v49, 13
    %v157 = vsel %vm156, 1, 0
    %vm158 = vcmp.eq.s32.totalorder %v157, 1
    %159 = vset.pattern.permute.xlu0 13
    %160 = vperm.xlu0 %159, %v50
    %v161 = vpop.permute.xlu0 %160
    %v163 = vsel %vm158, %v161, %v155
    %vm164 = vcmp.eq.s32.totalorder %v49, 14
    %v165 = vsel %vm164, 1, 0
    %vm166 = vcmp.eq.s32.totalorder %v165, 1
    %167 = vset.pattern.permute.xlu0 14
    %168 = vperm.xlu0 %167, %v50
    %v169 = vpop.permute.xlu0 %168
    %v171 = vsel %vm166, %v169, %v163
    %vm172 = vcmp.eq.s32.totalorder %v49, 15
    %v173 = vsel %vm172, 1, 0
    %vm174 = vcmp.eq.s32.totalorder %v173, 1
    %175 = vset.pattern.permute.xlu0 15
    %176 = vperm.xlu0 %175, %v50
    %v177 = vpop.permute.xlu0 %176
    %v179 = vsel %vm174, %v177, %v171
    %vm180 = vcmp.eq.s32.totalorder %v49, 16
    %v181 = vsel %vm180, 1, 0
    %vm182 = vcmp.eq.s32.totalorder %v181, 1
    %183 = vset.pattern.permute.xlu0 16
    %184 = vperm.xlu0 %183, %v50
    %v185 = vpop.permute.xlu0 %184
    %v187 = vsel %vm182, %v185, %v179
    %vm188 = vcmp.eq.s32.totalorder %v49, 17
    %v189 = vsel %vm188, 1, 0
    %vm190 = vcmp.eq.s32.totalorder %v189, 1
    %191 = vset.pattern.permute.xlu0 17
    %192 = vperm.xlu0 %191, %v50
    %v193 = vpop.permute.xlu0 %192
    %v195 = vsel %vm190, %v193, %v187
    %vm196 = vcmp.eq.s32.totalorder %v49, 18
    %v197 = vsel %vm196, 1, 0
    %vm198 = vcmp.eq.s32.totalorder %v197, 1
    %199 = vset.pattern.permute.xlu0 18
    %200 = vperm.xlu0 %199, %v50
    %v201 = vpop.permute.xlu0 %200
    %v203 = vsel %vm198, %v201, %v195
    %vm204 = vcmp.eq.s32.totalorder %v49, 19
    %v205 = vsel %vm204, 1, 0
    %vm206 = vcmp.eq.s32.totalorder %v205, 1
    %207 = vset.pattern.permute.xlu0 19
    %208 = vperm.xlu0 %207, %v50
    %v209 = vpop.permute.xlu0 %208
    %v211 = vsel %vm206, %v209, %v203
    %vm212 = vcmp.eq.s32.totalorder %v49, 20
    %v213 = vsel %vm212, 1, 0
    %vm214 = vcmp.eq.s32.totalorder %v213, 1
    %215 = vset.pattern.permute.xlu0 20
    %216 = vperm.xlu0 %215, %v50
    %v217 = vpop.permute.xlu0 %216
    %v219 = vsel %vm214, %v217, %v211
    %vm220 = vcmp.eq.s32.totalorder %v49, 21
    %v221 = vsel %vm220, 1, 0
    %vm222 = vcmp.eq.s32.totalorder %v221, 1
    %223 = vset.pattern.permute.xlu0 21
    %224 = vperm.xlu0 %223, %v50
    %v225 = vpop.permute.xlu0 %224
    %v227 = vsel %vm222, %v225, %v219
    %vm228 = vcmp.eq.s32.totalorder %v49, 22
    %v229 = vsel %vm228, 1, 0
    %vm230 = vcmp.eq.s32.totalorder %v229, 1
    %231 = vset.pattern.permute.xlu0 22
    %232 = vperm.xlu0 %231, %v50
    %v233 = vpop.permute.xlu0 %232
    %v235 = vsel %vm230, %v233, %v227
    %vm236 = vcmp.eq.s32.totalorder %v49, 23
    %v237 = vsel %vm236, 1, 0
    %vm238 = vcmp.eq.s32.totalorder %v237, 1
    %239 = vset.pattern.permute.xlu0 23
    %240 = vperm.xlu0 %239, %v50
    %v241 = vpop.permute.xlu0 %240
    %v243 = vsel %vm238, %v241, %v235
    %vm244 = vcmp.eq.s32.totalorder %v49, 24
    %v245 = vsel %vm244, 1, 0
    %vm246 = vcmp.eq.s32.totalorder %v245, 1
    %247 = vset.pattern.permute.xlu0 24
    %248 = vperm.xlu0 %247, %v50
    %v249 = vpop.permute.xlu0 %248
    %v251 = vsel %vm246, %v249, %v243
    %vm252 = vcmp.eq.s32.totalorder %v49, 25
    %v253 = vsel %vm252, 1, 0
    %vm254 = vcmp.eq.s32.totalorder %v253, 1
    %255 = vset.pattern.permute.xlu0 25
    %256 = vperm.xlu0 %255, %v50
    %v257 = vpop.permute.xlu0 %256
    %v259 = vsel %vm254, %v257, %v251
    %vm260 = vcmp.eq.s32.totalorder %v49, 26
    %v261 = vsel %vm260, 1, 0
    %vm262 = vcmp.eq.s32.totalorder %v261, 1
    %263 = vset.pattern.permute.xlu0 26
    %264 = vperm.xlu0 %263, %v50
    %v265 = vpop.permute.xlu0 %264
    %v267 = vsel %vm262, %v265, %v259
    %vm268 = vcmp.eq.s32.totalorder %v49, 27
    %v269 = vsel %vm268, 1, 0
    %vm270 = vcmp.eq.s32.totalorder %v269, 1
    %271 = vset.pattern.permute.xlu0 27
    %272 = vperm.xlu0 %271, %v50
    %v273 = vpop.permute.xlu0 %272
    %v275 = vsel %vm270, %v273, %v267
    %vm276 = vcmp.eq.s32.totalorder %v49, 28
    %v277 = vsel %vm276, 1, 0
    %vm278 = vcmp.eq.s32.totalorder %v277, 1
    %279 = vset.pattern.permute.xlu0 28
    %280 = vperm.xlu0 %279, %v50
    %v281 = vpop.permute.xlu0 %280
    %v283 = vsel %vm278, %v281, %v275
    %vm284 = vcmp.eq.s32.totalorder %v49, 29
    %v285 = vsel %vm284, 1, 0
    %vm286 = vcmp.eq.s32.totalorder %v285, 1
    %287 = vset.pattern.permute.xlu0 29
    %288 = vperm.xlu0 %287, %v50
    %v289 = vpop.permute.xlu0 %288
    %v291 = vsel %vm286, %v289, %v283
    %vm292 = vcmp.eq.s32.totalorder %v49, 30
    %v293 = vsel %vm292, 1, 0
    %vm294 = vcmp.eq.s32.totalorder %v293, 1
    %295 = vset.pattern.permute.xlu0 30
    %296 = vperm.xlu0 %295, %v50
    %v297 = vpop.permute.xlu0 %296
    %v299 = vsel %vm294, %v297, %v291
    %vm300 = vcmp.eq.s32.totalorder %v49, 31
    %v301 = vsel %vm300, 1, 0
    %vm302 = vcmp.eq.s32.totalorder %v301, 1
    %303 = vset.pattern.permute.xlu0 31
    %304 = vperm.xlu0 %303, %v50
    %v305 = vpop.permute.xlu0 %304
    %v307 = vsel %vm302, %v305, %v299
    %309 = vrot.lane.b32.xlu0 %v307, 121
    %v310 = vpop.permute.xlu0 %309
    %vm312 = vcmask 130048
    %313 = vst.msk [vmem:[#allocation5] sm:$0xff] %vm312, %v310
    %314 = vrot.lane.b32.xlu0 %v307, 10
    %v315 = vpop.permute.xlu0 %314
    %vm317 = vcmask 261248
    %318 = vst.msk [vmem:[#allocation5] sm:$0xff] %vm317, %v315
    %319 = vrot.lane.b32.xlu0 %v307, 27
    %v320 = vpop.permute.xlu0 %319
    %vm322 = vcmask 392448
    %323 = vst.msk [vmem:[#allocation5] sm:$0xff] %vm322, %v320
    %324 = vrot.lane.b32.xlu0 %v307, 44
    %v325 = vpop.permute.xlu0 %324
    %vm327 = vcmask 523648
    %328 = vst.msk [vmem:[#allocation5] sm:$0xff] %vm327, %v325
    %329 = vrot.lane.b32.xlu0 %v307, 61
    %v330 = vpop.permute.xlu0 %329
    %vm332 = vcmask 654848
    %333 = vst.msk [vmem:[#allocation5] sm:$0xff] %vm332, %v330
    %334 = vrot.lane.b32.xlu0 %v307, 78
    %v335 = vpop.permute.xlu0 %334
    %vm337 = vcmask 786048
    %338 = vst.msk [vmem:[#allocation5] sm:$0xff] %vm337, %v335
    %339 = vrot.lane.b32.xlu0 %v307, 95
    %v340 = vpop.permute.xlu0 %339
    %vm342 = vcmask 917248
    %343 = vst.msk [vmem:[#allocation5] sm:$0xff] %vm342, %v340
    %344 = vrot.lane.b32.xlu0 %v307, 112
    %v345 = vpop.permute.xlu0 %344
    %vm347 = vcmask 1048448
    %348 = vst.msk [vmem:[#allocation5] sm:$0xff] %vm347, %v345
    // Predicated region
    $region10: #{tpu_custom_call.1} parent=1 // pred_check
      _
    $region11: #{tpu_custom_call.1} parent=1 // pred_check_branch
      %350 = sbr.rel (0) target = $region13
    $region12: #{tpu_custom_call.1} parent=1 // pred_region
      %s352 = ssub.s32 128, 128
      %353 = vsyncadd [#allocation4], %s352
      %s355 = sshll.u32 [#allocation5], 4
      %s356 = int_to_ptr.vmem [resolvable:$true] %s355
      %358 = dma.vmem_to_hbm [thread:$0]  %s356, 128, %s1, [#allocation4]
    $region13: #{tpu_custom_call.1} parent=1 // pred_fallthru
      _
    // Predicated region
    $region14: #{tpu_custom_call.1} parent=1 // pred_check
      _
    $region15: #{tpu_custom_call.1} parent=1 // pred_check_branch
      %360 = sbr.rel (0) target = $region17
    $region16: #{tpu_custom_call.1} parent=1 // pred_region
      %361 = dma.done [#allocation4], 128
    $region17: #{tpu_custom_call.1} parent=1 // pred_fallthru
      _
    %362 = vsyncpa [#allocation3], 1
    %363 = vsyncpa [#allocation4], 1

</llo_original>
